<compile_context>
chip_gen: v5e
topology: v5e:2x2
jax: 0.10.0
libtpu: 0.0.40
codegen_flags: <defaults>
</compile_context>

<pallas_src>
import functools

import jax
import jax.numpy as jnp
from jax.experimental import pallas as pl
from jax.experimental.pallas import tpu as pltpu

K = 3          # conv kernel size (stride=1, padding=1)
EPS = 1e-12    # LayerNorm eps (matches torch.nn.LayerNorm(nout, eps=1e-12))


# ----------------------------- kernel ---------------------------------------
def duration_predictor_kernel(x_ref, w0_ref, w1_ref, vec_ref, out_ref, *, seq):
    """One row-tile (whole sequences only) of the fused forward.

    x_ref  : (rows, IDIM) f32, rows a multiple of `seq`
    w0_ref : (3*IDIM, NCH) stacked conv-0 weights [W[0]; W[1]; W[2]]
    w1_ref : (3*NCH,  NCH) stacked conv-1 weights  (same dtype as w0)
    vec_ref: (8, NCH) f32 packed small params:
        row 0: conv0 bias    row 1: LN0 gamma    row 2: LN0 beta
        row 3: conv1 bias    row 4: LN1_gamma * linear_w        (folded)
        row 5: sum(LN1_gamma * linear_w)          (broadcast across lanes)
        row 6: sum(LN1_beta  * linear_w) + linear_b (broadcast)
        row 7: zero padding
    out_ref: (rows, 1) f32 log-domain durations
    """
    rows = x_ref.shape[0]                       # static
    mm_dtype = w0_ref.dtype                     # bf16 (default) or f32

    # Position of each row inside its own sequence.  Row tiles always start on
    # a sequence boundary (rows % seq == 0), so iota % seq is valid.
    t_pos = jax.lax.broadcasted_iota(jnp.int32, (rows, 1), 0) % seq
    is_first = t_pos == 0
    is_last = t_pos == (seq - 1)

    vec = vec_ref[...]                          # (8, NCH) f32

    def conv_bias_relu(h, w_ref, bias):
        # Neighbour rows via XLU rolls (zeroed at sequence edges), then ONE
        # im2col MXU matmul.  Operands cast to mm_dtype (bf16: single MXU pass);
        # accumulation + bias/ReLU stay in f32.
        left = jnp.where(is_first, 0.0, pltpu.roll(h, 1, 0))         # x[t-1]
        right = jnp.where(is_last, 0.0, pltpu.roll(h, rows - 1, 0))  # x[t+1]
        patches = jnp.concatenate([left, h, right], axis=-1).astype(mm_dtype)
        y = jnp.dot(patches, w_ref[...], preferred_element_type=jnp.float32)
        return jnp.maximum(y + bias, 0.0)

    def moments(y):
        # Two INDEPENDENT lane reductions (pipeline through the XLU instead of
        # back-to-back dependent passes); var = E[y^2] - mean^2, clamped >= 0.
        inv_n = 1.0 / y.shape[-1]
        s1 = jnp.sum(y, axis=-1, keepdims=True)
        s2 = jnp.sum(y * y, axis=-1, keepdims=True)
        mean = s1 * inv_n
        var = jnp.maximum(s2 * inv_n - mean * mean, 0.0)
        return mean, var

    # ---- layer 0: conv + bias + ReLU + full LayerNorm(C) ----
    y0 = conv_bias_relu(x_ref[...], w0_ref, vec[0:1])
    m0, v0 = moments(y0)
    h = (y0 - m0) * jax.lax.rsqrt(v0 + EPS) * vec[1:2] + vec[2:3]

    # ---- layer 1: conv + bias + ReLU; LN1 affine + Linear(C->1) folded ----
    #   out = rsqrt(var+eps) * (sum(y*(g1*lw)) - mean*sum(g1*lw))
    #         + (sum(be1*lw) + lb)
    y1 = conv_bias_relu(h, w1_ref, vec[3:4])
    m1, v1 = moments(y1)
    glw = vec[4:5]                              # (1, NCH)  g1 * lw
    sglw = vec[5:6, 0:1]                        # (1, 1)    sum(g1 * lw)
    const = vec[6:7, 0:1]                       # (1, 1)    sum(be1 * lw) + lb
    proj = jnp.sum(y1 * glw, axis=-1, keepdims=True)
    out_ref[...] = jax.lax.rsqrt(v1 + EPS) * (proj - m1 * sglw) + const
    # Dropout is identity (eval-mode semantics).
    # TODO(synk): training-mode dropout not implemented in-kernel (would need
    #             pltpu.prng_seed / prng_random_bits); forward matches eval().


# ----------------------------- wrapper ---------------------------------------
def _rows_per_block(batch, seq, target_rows):
    """Largest whole-sequence row tile <= target_rows whose count divides batch.

    Tiles MUST start on sequence boundaries (multiple of `seq` rows) so the
    t_pos masks and roll-based neighbour fetch stay valid.  The ~1024-row cap
    keeps the live f32 footprint (~0.8 KB/row + double-buffered input) well
    under v7x's 32 MiB default scoped VMEM while sitting on the pipelined-DMA
    plateau for large B*T.
    """
    max_seqs = max(1, target_rows // seq)
    spb = 1
    for d in range(1, min(batch, max_seqs) + 1):
        if batch % d == 0:
            spb = d
    return spb * seq


def duration_predictor_forward(xs, params, x_masks=None, *,
                               matmul_dtype=jnp.bfloat16,
                               target_rows_per_block=1024):
    """xs: (B, T, idim) f32 -> (B, T) f32 log-domain durations (eval forward)."""
    (w0, b0, g0, be0, w1, b1, g1, be1, lw, lb) = params
    batch, seq, idim = xs.shape
    nch = w0.shape[2]
    rows = batch * seq

    # Host-side repack: 4 kernel operands instead of 11.  Conv weights stacked
    # over taps and cast to the matmul dtype; LN1 affine + Linear folded into
    # three precomputed quantities inside `vec`.
    w0r = w0.reshape(K * idim, nch).astype(matmul_dtype)     # [W[0]; W[1]; W[2]]
    w1r = w1.reshape(K * nch, nch).astype(matmul_dtype)
    glw = (g1 * lw).astype(jnp.float32)                      # (1, nch)
    sglw = jnp.sum(glw)
    const = jnp.sum(be1 * lw) + lb[0, 0]
    vec = jnp.concatenate(
        [b0, g0, be0, b1, glw,
         jnp.full((1, nch), sglw, jnp.float32),
         jnp.full((1, nch), const, jnp.float32),
         jnp.zeros((1, nch), jnp.float32)], axis=0)          # (8, nch)

    rpb = _rows_per_block(batch, seq, target_rows_per_block)
    nb = rows // rpb

    itemsize = jnp.dtype(matmul_dtype).itemsize
    cost = pl.CostEstimate(
        flops=int(2 * rows * (K * idim * nch + K * nch * nch) + 20 * rows * nch),
        transcendentals=int(2 * rows),                       # two rsqrt per row
        bytes_accessed=int(rows * idim * 4 + rows * 4 + 8 * nch * 4
                           + (K * idim * nch + K * nch * nch) * itemsize),
    )

    out = pl.pallas_call(
        functools.partial(duration_predictor_kernel, seq=seq),
        out_shape=jax.ShapeDtypeStruct((rows, 1), jnp.float32),
        grid=(nb,),
        in_specs=[
            pl.BlockSpec((rpb, idim), lambda i: (i, 0)),       # pipelined row tiles
            pl.BlockSpec((K * idim, nch), lambda i: (0, 0)),   # weights stay resident
            pl.BlockSpec((K * nch, nch), lambda i: (0, 0)),
            pl.BlockSpec((8, nch), lambda i: (0, 0)),
        ],
        # TODO(synk): if rows ever reaches ~1e6+, stage the per-row scalar through
        # a lane-dense (multiple-of-128) output tile to avoid masked vst; at these
        # sizes the (rows, 1) store is noise next to the input bytes.
        out_specs=pl.BlockSpec((rpb, 1), lambda i: (i, 0)),
        compiler_params=pltpu.CompilerParams(
            dimension_semantics=("parallel",)),  # megacore shards row tiles on v7x
        cost_estimate=cost,
    )(xs.reshape(rows, idim), w0r, w1r, vec)

    out = out.reshape(batch, seq)                            # free wrapper-side squeeze
    if x_masks is not None:
        out = jnp.where(x_masks, 0.0, out)                   # masked_fill(x_masks, 0.0)
    return out


# ----------------------------- reference (plain JAX, f32) --------------------
def _ref_forward(xs, params):
    (w0, b0, g0, be0, w1, b1, g1, be1, lw, lb) = params
    h = xs
    seq = xs.shape[1]
    for (w, b, g, beta) in ((w0, b0, g0, be0), (w1, b1, g1, be1)):
        hp = jnp.pad(h, ((0, 0), (1, 1), (0, 0)))
        y = sum(jnp.einsum("btc,cd->btd", hp[:, k:k + seq], w[k]) for k in range(K))
        y = jnp.maximum(y + b, 0.0)
        mean = jnp.mean(y, axis=-1, keepdims=True)
        var = jnp.mean(jnp.square(y - mean), axis=-1, keepdims=True)
        h = (y - mean) * jax.lax.rsqrt(var + EPS) * g + beta
    return jnp.sum(h * lw, axis=-1) + lb[0, 0]


# ----------------------------- main -------------------------------------------
if __name__ == "__main__":
    B, T, IDIM, NCH = 2, 16, 32, 32

    key = jax.random.PRNGKey(0)
    keys = jax.random.split(key, 8)

    # Deterministic synthetic parameters (conv weights already (K, Cin, Cout)).
    w0 = 0.1 * jax.random.normal(keys[0], (K, IDIM, NCH), jnp.float32)   # conv0 weight
    b0 = 0.1 * jax.random.normal(keys[1], (1, NCH), jnp.float32)          # conv0 bias
    g0 = jnp.ones((1, NCH), jnp.float32)                                  # LN0 gamma
    be0 = jnp.zeros((1, NCH), jnp.float32)                                # LN0 beta
    w1 = 0.1 * jax.random.normal(keys[2], (K, NCH, NCH), jnp.float32)     # conv1 weight
    b1 = 0.1 * jax.random.normal(keys[3], (1, NCH), jnp.float32)          # conv1 bias
    g1 = jnp.ones((1, NCH), jnp.float32)                                  # LN1 gamma
    be1 = jnp.zeros((1, NCH), jnp.float32)                                # LN1 beta
    lw = 0.1 * jax.random.normal(keys[4], (1, NCH), jnp.float32)          # linear weight
    lb = 0.1 * jax.random.normal(keys[5], (1, 1), jnp.float32)            # linear bias
    params = (w0, b0, g0, be0, w1, b1, g1, be1, lw, lb)

    xs = jax.random.normal(keys[6], (B, T, IDIM), jnp.float32)
    ref = _ref_forward(xs, params)

    # 1) Default bf16-MXU path (f32 accumulation / elementwise): loose tolerance
    #    accounts only for bf16 operand rounding.
    out_bf16 = jax.block_until_ready(duration_predictor_forward(xs, params))
    assert out_bf16.shape == (B, T)
    assert jnp.allclose(out_bf16, ref, atol=5e-2, rtol=5e-2), "bf16 path mismatch"

    # 2) f32-MXU path: tight check of the fused structure vs the JAX reference.
    out_f32 = jax.block_until_ready(
        duration_predictor_forward(xs, params, matmul_dtype=jnp.float32))
    assert jnp.allclose(out_f32, ref, atol=2e-4, rtol=2e-4), "f32 path mismatch"

    # 3) Multi-block pipelined row grid (whole-sequence tiles) at a larger batch.
    xs2 = jax.random.normal(keys[7], (128, T, IDIM), jnp.float32)          # 2 tiles of 1024 rows
    out2 = jax.block_until_ready(
        duration_predictor_forward(xs2, params, matmul_dtype=jnp.float32))
    ref2 = _ref_forward(xs2, params)
    assert out2.shape == (128, T)
    assert jnp.allclose(out2, ref2, atol=2e-4, rtol=2e-4), "tiled-grid mismatch"

    # 4) Mask path (masked_fill semantics).
    masks = jnp.tile(jnp.arange(T)[None, :] >= 12, (B, 1))
    out_m = jax.block_until_ready(
        duration_predictor_forward(xs, params, x_masks=masks, matmul_dtype=jnp.float32))
    assert jnp.allclose(out_m, jnp.where(masks, 0.0, ref), atol=2e-4, rtol=2e-4)

    print("KERNEL_OK")
</pallas_src>

<mosaic_0001>
module attributes {stable_mosaic.version = 11 : i64} {
  func.func @duration_predictor_kernel(%arg0: i32, %arg1: memref<32x32xf32, #tpu.memory_space<vmem>>, %arg2: memref<96x32xbf16, #tpu.memory_space<vmem>>, %arg3: memref<96x32xbf16, #tpu.memory_space<vmem>>, %arg4: memref<8x32xf32, #tpu.memory_space<vmem>>, %arg5: memref<32x1xf32, #tpu.memory_space<vmem>>) attributes {dimension_semantics = [#tpu.dimension_semantics<parallel>], iteration_bounds = array<i64: 1>, scalar_prefetch = 0 : i64, scratch_operands = 0 : i64, tpu.core_type = #tpu.core_type<tc>, window_params = [{transform_indices = @transform_0, window_bounds = array<i64: 32, 32>}, {pipeline_mode = #tpu.pipeline_mode<synchronous>, transform_indices = @transform_1, window_bounds = array<i64: 96, 32>}, {pipeline_mode = #tpu.pipeline_mode<synchronous>, transform_indices = @transform_2, window_bounds = array<i64: 96, 32>}, {pipeline_mode = #tpu.pipeline_mode<synchronous>, transform_indices = @transform_3, window_bounds = array<i64: 8, 32>}, {transform_indices = @transform_4, window_bounds = array<i64: 32, 1>}]} {
    %0 = tpu.iota {dimensions = array<i32: 0>} : vector<32x1xi32>
    %c16_i32 = arith.constant 16 : i32
    %c0_i32 = arith.constant 0 : i32
    %1 = arith.cmpi eq, %c16_i32, %c0_i32 : i32
    %c1_i32 = arith.constant 1 : i32
    %2 = arith.select %1, %c1_i32, %c16_i32 : i32
    %3 = vector.broadcast %2 : i32 to vector<32x1xi32>
    %4 = arith.remsi %0, %3 : vector<32x1xi32>
    %c0_i32_0 = arith.constant 0 : i32
    %5 = vector.broadcast %c0_i32_0 : i32 to vector<32x1xi32>
    %6 = arith.cmpi ne, %4, %5 : vector<32x1xi32>
    %c0_i32_1 = arith.constant 0 : i32
    %7 = vector.broadcast %c0_i32_1 : i32 to vector<32x1xi32>
    %8 = arith.cmpi slt, %4, %7 : vector<32x1xi32>
    %c0_i32_2 = arith.constant 0 : i32
    %9 = arith.cmpi slt, %2, %c0_i32_2 : i32
    %10 = vector.broadcast %9 : i1 to vector<32x1xi1>
    %11 = vector.broadcast %10 : vector<32x1xi1> to vector<32x1xi1>
    %12 = arith.xori %8, %11 : vector<32x1xi1>
    %13 = arith.andi %12, %6 : vector<32x1xi1>
    %14 = vector.broadcast %2 : i32 to vector<32x1xi32>
    %15 = arith.addi %4, %14 : vector<32x1xi32>
    %16 = arith.select %13, %15, %4 : vector<32x1xi1>, vector<32x1xi32>
    %c0_i32_3 = arith.constant 0 : i32
    %17 = vector.broadcast %c0_i32_3 : i32 to vector<32x1xi32>
    %18 = arith.cmpi eq, %16, %17 : vector<32x1xi32>
    %c15_i32 = arith.constant 15 : i32
    %19 = vector.broadcast %c15_i32 : i32 to vector<32x1xi32>
    %20 = arith.cmpi eq, %16, %19 : vector<32x1xi32>
    %c0 = arith.constant 0 : index
    %c0_4 = arith.constant 0 : index
    %21 = vector.load %arg4[%c0, %c0_4] : memref<8x32xf32, #tpu.memory_space<vmem>>, vector<8x32xf32>
    %c0_5 = arith.constant 0 : index
    %c0_6 = arith.constant 0 : index
    %22 = vector.load %arg1[%c0_5, %c0_6] : memref<32x32xf32, #tpu.memory_space<vmem>>, vector<32x32xf32>
    %23 = vector.extract_strided_slice %21 {offsets = [0, 0], sizes = [1, 32], strides = [1, 1]} : vector<8x32xf32> to vector<1x32xf32>
    %c1_i32_7 = arith.constant 1 : i32
    %24 = tpu.dynamic_rotate %22 by %c1_i32_7 dim 0 : vector<32x32xf32>, i32 -> vector<32x32xf32>
    %cst = arith.constant 0.000000e+00 : f32
    %25 = vector.shape_cast %18 : vector<32x1xi1> to vector<32x1xi1>
    %26 = vector.broadcast %25 : vector<32x1xi1> to vector<32x32xi1>
    %27 = vector.broadcast %cst : f32 to vector<32x32xf32>
    %28 = arith.select %26, %27, %24 : vector<32x32xi1>, vector<32x32xf32>
    %c31_i32 = arith.constant 31 : i32
    %29 = tpu.dynamic_rotate %22 by %c31_i32 dim 0 : vector<32x32xf32>, i32 -> vector<32x32xf32>
    %cst_8 = arith.constant 0.000000e+00 : f32
    %30 = vector.shape_cast %20 : vector<32x1xi1> to vector<32x1xi1>
    %31 = vector.broadcast %30 : vector<32x1xi1> to vector<32x32xi1>
    %32 = vector.broadcast %cst_8 : f32 to vector<32x32xf32>
    %33 = arith.select %31, %32, %29 : vector<32x32xi1>, vector<32x32xf32>
    %34 = tpu.concatenate %28, %22, %33 in 1 : vector<32x32xf32>, vector<32x32xf32>, vector<32x32xf32> -> vector<32x96xf32>
    %35 = arith.truncf %34 : vector<32x96xf32> to vector<32x96xbf16>
    %c0_9 = arith.constant 0 : index
    %c0_10 = arith.constant 0 : index
    %36 = vector.load %arg2[%c0_9, %c0_10] : memref<96x32xbf16, #tpu.memory_space<vmem>>, vector<96x32xbf16>
    %cst_11 = arith.constant dense<0.000000e+00> : vector<32x32xf32>
    %37 = tpu.matmul %35, %36, %cst_11 {dimension_numbers = #tpu.dot_dimension_numbers<[1], [0], [0], [1], [0, 0, 1, 1], [], []>} : vector<32x96xbf16>, vector<96x32xbf16>, vector<32x32xf32> -> vector<32x32xf32>
    %38 = vector.broadcast %23 : vector<1x32xf32> to vector<32x32xf32>
    %39 = arith.addf %37, %38 : vector<32x32xf32>
    %cst_12 = arith.constant 0.000000e+00 : f32
    %40 = vector.broadcast %cst_12 : f32 to vector<32x32xf32>
    %41 = arith.maximumf %39, %40 : vector<32x32xf32>
    %cst_13 = arith.constant dense<0.000000e+00> : vector<32xf32>
    %42 = vector.multi_reduction <add>, %41, %cst_13 [1] : vector<32x32xf32> to vector<32xf32>
    %43 = vector.shape_cast %42 : vector<32xf32> to vector<32x1xf32>
    %44 = arith.mulf %41, %41 : vector<32x32xf32>
    %cst_14 = arith.constant dense<0.000000e+00> : vector<32xf32>
    %45 = vector.multi_reduction <add>, %44, %cst_14 [1] : vector<32x32xf32> to vector<32xf32>
    %46 = vector.shape_cast %45 : vector<32xf32> to vector<32x1xf32>
    %cst_15 = arith.constant 3.125000e-02 : f32
    %47 = vector.broadcast %cst_15 : f32 to vector<32x1xf32>
    %48 = arith.mulf %43, %47 : vector<32x1xf32>
    %cst_16 = arith.constant 3.125000e-02 : f32
    %49 = vector.broadcast %cst_16 : f32 to vector<32x1xf32>
    %50 = arith.mulf %46, %49 : vector<32x1xf32>
    %51 = arith.mulf %48, %48 : vector<32x1xf32>
    %52 = arith.subf %50, %51 : vector<32x1xf32>
    %cst_17 = arith.constant 0.000000e+00 : f32
    %53 = vector.broadcast %cst_17 : f32 to vector<32x1xf32>
    %54 = arith.maximumf %52, %53 : vector<32x1xf32>
    %55 = vector.broadcast %48 : vector<32x1xf32> to vector<32x32xf32>
    %56 = arith.subf %41, %55 : vector<32x32xf32>
    %cst_18 = arith.constant 9.99999996E-13 : f32
    %57 = vector.broadcast %cst_18 : f32 to vector<32x1xf32>
    %58 = arith.addf %54, %57 : vector<32x1xf32>
    %59 = math.rsqrt %58 : vector<32x1xf32>
    %60 = vector.broadcast %59 : vector<32x1xf32> to vector<32x32xf32>
    %61 = arith.mulf %56, %60 : vector<32x32xf32>
    %62 = vector.extract_strided_slice %21 {offsets = [1, 0], sizes = [1, 32], strides = [1, 1]} : vector<8x32xf32> to vector<1x32xf32>
    %63 = vector.broadcast %62 : vector<1x32xf32> to vector<32x32xf32>
    %64 = arith.mulf %61, %63 : vector<32x32xf32>
    %65 = vector.extract_strided_slice %21 {offsets = [2, 0], sizes = [1, 32], strides = [1, 1]} : vector<8x32xf32> to vector<1x32xf32>
    %66 = vector.broadcast %65 : vector<1x32xf32> to vector<32x32xf32>
    %67 = arith.addf %64, %66 : vector<32x32xf32>
    %68 = vector.extract_strided_slice %21 {offsets = [3, 0], sizes = [1, 32], strides = [1, 1]} : vector<8x32xf32> to vector<1x32xf32>
    %c1_i32_19 = arith.constant 1 : i32
    %69 = tpu.dynamic_rotate %67 by %c1_i32_19 dim 0 : vector<32x32xf32>, i32 -> vector<32x32xf32>
    %cst_20 = arith.constant 0.000000e+00 : f32
    %70 = vector.shape_cast %18 : vector<32x1xi1> to vector<32x1xi1>
    %71 = vector.broadcast %70 : vector<32x1xi1> to vector<32x32xi1>
    %72 = vector.broadcast %cst_20 : f32 to vector<32x32xf32>
    %73 = arith.select %71, %72, %69 : vector<32x32xi1>, vector<32x32xf32>
    %c31_i32_21 = arith.constant 31 : i32
    %74 = tpu.dynamic_rotate %67 by %c31_i32_21 dim 0 : vector<32x32xf32>, i32 -> vector<32x32xf32>
    %cst_22 = arith.constant 0.000000e+00 : f32
    %75 = vector.shape_cast %20 : vector<32x1xi1> to vector<32x1xi1>
    %76 = vector.broadcast %75 : vector<32x1xi1> to vector<32x32xi1>
    %77 = vector.broadcast %cst_22 : f32 to vector<32x32xf32>
    %78 = arith.select %76, %77, %74 : vector<32x32xi1>, vector<32x32xf32>
    %79 = tpu.concatenate %73, %67, %78 in 1 : vector<32x32xf32>, vector<32x32xf32>, vector<32x32xf32> -> vector<32x96xf32>
    %80 = arith.truncf %79 : vector<32x96xf32> to vector<32x96xbf16>
    %c0_23 = arith.constant 0 : index
    %c0_24 = arith.constant 0 : index
    %81 = vector.load %arg3[%c0_23, %c0_24] : memref<96x32xbf16, #tpu.memory_space<vmem>>, vector<96x32xbf16>
    %cst_25 = arith.constant dense<0.000000e+00> : vector<32x32xf32>
    %82 = tpu.matmul %80, %81, %cst_25 {dimension_numbers = #tpu.dot_dimension_numbers<[1], [0], [0], [1], [0, 0, 1, 1], [], []>} : vector<32x96xbf16>, vector<96x32xbf16>, vector<32x32xf32> -> vector<32x32xf32>
    %83 = vector.broadcast %68 : vector<1x32xf32> to vector<32x32xf32>
    %84 = arith.addf %82, %83 : vector<32x32xf32>
    %cst_26 = arith.constant 0.000000e+00 : f32
    %85 = vector.broadcast %cst_26 : f32 to vector<32x32xf32>
    %86 = arith.maximumf %84, %85 : vector<32x32xf32>
    %cst_27 = arith.constant dense<0.000000e+00> : vector<32xf32>
    %87 = vector.multi_reduction <add>, %86, %cst_27 [1] : vector<32x32xf32> to vector<32xf32>
    %88 = vector.shape_cast %87 : vector<32xf32> to vector<32x1xf32>
    %89 = arith.mulf %86, %86 : vector<32x32xf32>
    %cst_28 = arith.constant dense<0.000000e+00> : vector<32xf32>
    %90 = vector.multi_reduction <add>, %89, %cst_28 [1] : vector<32x32xf32> to vector<32xf32>
    %91 = vector.shape_cast %90 : vector<32xf32> to vector<32x1xf32>
    %cst_29 = arith.constant 3.125000e-02 : f32
    %92 = vector.broadcast %cst_29 : f32 to vector<32x1xf32>
    %93 = arith.mulf %88, %92 : vector<32x1xf32>
    %cst_30 = arith.constant 3.125000e-02 : f32
    %94 = vector.broadcast %cst_30 : f32 to vector<32x1xf32>
    %95 = arith.mulf %91, %94 : vector<32x1xf32>
    %96 = arith.mulf %93, %93 : vector<32x1xf32>
    %97 = arith.subf %95, %96 : vector<32x1xf32>
    %cst_31 = arith.constant 0.000000e+00 : f32
    %98 = vector.broadcast %cst_31 : f32 to vector<32x1xf32>
    %99 = arith.maximumf %97, %98 : vector<32x1xf32>
    %100 = vector.extract_strided_slice %21 {offsets = [4, 0], sizes = [1, 32], strides = [1, 1]} : vector<8x32xf32> to vector<1x32xf32>
    %101 = vector.extract_strided_slice %21 {offsets = [5, 0], sizes = [1, 1], strides = [1, 1]} : vector<8x32xf32> to vector<1x1xf32>
    %102 = vector.extract_strided_slice %21 {offsets = [6, 0], sizes = [1, 1], strides = [1, 1]} : vector<8x32xf32> to vector<1x1xf32>
    %103 = vector.broadcast %100 : vector<1x32xf32> to vector<32x32xf32>
    %104 = arith.mulf %86, %103 : vector<32x32xf32>
    %cst_32 = arith.constant dense<0.000000e+00> : vector<32xf32>
    %105 = vector.multi_reduction <add>, %104, %cst_32 [1] : vector<32x32xf32> to vector<32xf32>
    %106 = vector.shape_cast %105 : vector<32xf32> to vector<32x1xf32>
    %cst_33 = arith.constant 9.99999996E-13 : f32
    %107 = vector.broadcast %cst_33 : f32 to vector<32x1xf32>
    %108 = arith.addf %99, %107 : vector<32x1xf32>
    %109 = math.rsqrt %108 : vector<32x1xf32>
    %110 = vector.broadcast %101 : vector<1x1xf32> to vector<32x1xf32>
    %111 = arith.mulf %93, %110 : vector<32x1xf32>
    %112 = arith.subf %106, %111 : vector<32x1xf32>
    %113 = arith.mulf %109, %112 : vector<32x1xf32>
    %114 = vector.broadcast %102 : vector<1x1xf32> to vector<32x1xf32>
    %115 = arith.addf %113, %114 : vector<32x1xf32>
    %c0_34 = arith.constant 0 : index
    %c0_35 = arith.constant 0 : index
    %116 = vector.load %arg5[%c0_34, %c0_35] : memref<32x1xf32, #tpu.memory_space<vmem>>, vector<32x1xf32>
    tpu.vector_store %arg5[%c0_34, %c0_35], %115 {strides = array<i32>} : memref<32x1xf32, #tpu.memory_space<vmem>>, vector<32x1xf32>,
    return
  }
  func.func @transform_0(%arg0: i32) -> (i32, i32) {
    %c0_i32 = arith.constant 0 : i32
    %c0_i32_0 = arith.constant 0 : i32
    return %arg0, %c0_i32 : i32, i32
  }
  func.func @transform_1(%arg0: i32) -> (i32, i32) {
    %c0_i32 = arith.constant 0 : i32
    %c0_i32_0 = arith.constant 0 : i32
    %c0_i32_1 = arith.constant 0 : i32
    return %c0_i32, %c0_i32_0 : i32, i32
  }
  func.func @transform_2(%arg0: i32) -> (i32, i32) {
    %c0_i32 = arith.constant 0 : i32
    %c0_i32_0 = arith.constant 0 : i32
    %c0_i32_1 = arith.constant 0 : i32
    return %c0_i32, %c0_i32_0 : i32, i32
  }
  func.func @transform_3(%arg0: i32) -> (i32, i32) {
    %c0_i32 = arith.constant 0 : i32
    %c0_i32_0 = arith.constant 0 : i32
    %c0_i32_1 = arith.constant 0 : i32
    return %c0_i32, %c0_i32_0 : i32, i32
  }
  func.func @transform_4(%arg0: i32) -> (i32, i32) {
    %c0_i32 = arith.constant 0 : i32
    %c0_i32_0 = arith.constant 0 : i32
    return %arg0, %c0_i32 : i32, i32
  }
}

</mosaic_0001>

<llo_original>
// kernel: tpu_custom_call.1
$region0: #{tpu_custom_call.1}
  #allocation0 [shape = 'u32[]', space=smem, size = 0x4, offset = 0x4, fixed_abs, tag = 'smem constant byte address 0x4 - core index']
  #allocation1 [shape = 'u32[72,128]{1,0:T(1,128)}', space=vmem, size = 0x9000, scoped, tag = 'internal scratch']
  %s0 = inlined_call_operand.vmem [shape: f32[32,32], index: 0, kind: input, shape index: {}]
  %s1 = inlined_call_operand.vmem [shape: bf16[96,32], index: 1, kind: input, shape index: {}]
  %s2 = inlined_call_operand.vmem [shape: bf16[96,32], index: 2, kind: input, shape index: {}]
  %s3 = inlined_call_operand.vmem [shape: f32[8,32], index: 3, kind: input, shape index: {}]
  %s4 = inlined_call_operand.vmem [shape: f32[32,1], index: 4, kind: output, shape index: {}]
  %s5 = sld [smem:[#allocation0]]
  $region26: #{tpu_custom_call.1} parent=0
    _
  %s7 = ssub.s32 1, %s5
  %s8 = scalar_select 0, %s7, %s5
  // Predicated region
  $region2: #{tpu_custom_call.1} parent=0 // pred_check
    _
  $region3: #{tpu_custom_call.1} parent=0 // pred_check_branch
    %10 = sbr.rel (0) target = $region5
  $region4: #{tpu_custom_call.1} parent=0 // pred_region
    _
  $region5: #{tpu_custom_call.1} parent=0 // pred_fallthru
    _
  // Predicated region
  $region6: #{tpu_custom_call.1} parent=0 // pred_check
    _
  $region7: #{tpu_custom_call.1} parent=0 // pred_check_branch
    %12 = sbr.rel (0) target = $region9
  $region8: #{tpu_custom_call.1} parent=0 // pred_region
    _
  $region9: #{tpu_custom_call.1} parent=0 // pred_fallthru
    _
  // Predicated region
  $region10: #{tpu_custom_call.1} parent=0 // pred_check
    _
  $region11: #{tpu_custom_call.1} parent=0 // pred_check_branch
    %14 = sbr.rel (0) target = $region13
  $region12: #{tpu_custom_call.1} parent=0 // pred_region
    _
  $region13: #{tpu_custom_call.1} parent=0 // pred_fallthru
    _
  // Predicated region
  $region14: #{tpu_custom_call.1} parent=0 // pred_check
    _
  $region15: #{tpu_custom_call.1} parent=0 // pred_check_branch
    %16 = sbr.rel (0) target = $region17
  $region16: #{tpu_custom_call.1} parent=0 // pred_region
    _
  $region17: #{tpu_custom_call.1} parent=0 // pred_fallthru
    _
  %v18 = vlaneseq
  %v19 = vshrl.u32 %v18, 7
  %v20 = vadd.s32 %v19, 8
  %v21 = vadd.s32 %v19, 16
  %v22 = vadd.s32 %v19, 24
  %vm23 = vcmp.lt.s32.totalorder %v19, 0
  %v24 = vsub.s32 0, %v19
  %v25 = vsel %vm23, %v24, %v19
  %v26 = vshrl.u32 %v25, 4
  %v27 = vand.u32 %v25, 15
  %v28 = vsub.s32 0, %v27
  %v29 = vsel %vm23, %v28, %v27
  %vm30 = vcmp.lt.s32.totalorder %v20, 0
  %v31 = vsub.s32 0, %v20
  %v32 = vsel %vm30, %v31, %v20
  %v33 = vshrl.u32 %v32, 4
  %v34 = vand.u32 %v32, 15
  %v35 = vsub.s32 0, %v34
  %v36 = vsel %vm30, %v35, %v34
  %vm37 = vcmp.lt.s32.totalorder %v21, 0
  %v38 = vsub.s32 0, %v21
  %v39 = vsel %vm37, %v38, %v21
  %v40 = vshrl.u32 %v39, 4
  %v41 = vand.u32 %v39, 15
  %v42 = vsub.s32 0, %v41
  %v43 = vsel %vm37, %v42, %v41
  %vm44 = vcmp.lt.s32.totalorder %v22, 0
  %v45 = vsub.s32 0, %v22
  %v46 = vsel %vm44, %v45, %v22
  %v47 = vshrl.u32 %v46, 4
  %v48 = vand.u32 %v46, 15
  %v49 = vsub.s32 0, %v48
  %v50 = vsel %vm44, %v49, %v48
  %vm51 = vcmp.ne.s32.totalorder %v29, 0
  %vm52 = vcmp.ne.s32.totalorder %v36, 0
  %vm53 = vcmp.ne.s32.totalorder %v43, 0
  %vm54 = vcmp.ne.s32.totalorder %v50, 0
  %vm55 = vcmp.lt.s32.totalorder %v29, 0
  %vm56 = vcmp.lt.s32.totalorder %v36, 0
  %vm57 = vcmp.lt.s32.totalorder %v43, 0
  %vm58 = vcmp.lt.s32.totalorder %v50, 0
  %vm59 = vmand %vm55, %vm51
  %vm60 = vmand %vm56, %vm52
  %vm61 = vmand %vm57, %vm53
  %vm62 = vmand %vm58, %vm54
  %v63 = vadd.s32 %v29, 16
  %v64 = vadd.s32 %v36, 16
  %v65 = vadd.s32 %v43, 16
  %v66 = vadd.s32 %v50, 16
  %v67 = vsel %vm59, %v63, %v29
  %v68 = vsel %vm60, %v64, %v36
  %v69 = vsel %vm61, %v65, %v43
  %v70 = vsel %vm62, %v66, %v50
  %vm71 = vcmp.eq.s32.totalorder %v67, 0
  %vm72 = vcmp.eq.s32.totalorder %v68, 0
  %vm73 = vcmp.eq.s32.totalorder %v69, 0
  %vm74 = vcmp.eq.s32.totalorder %v70, 0
  %vm75 = vcmp.eq.s32.totalorder %v67, 15
  %vm76 = vcmp.eq.s32.totalorder %v68, 15
  %vm77 = vcmp.eq.s32.totalorder %v69, 15
  %vm78 = vcmp.eq.s32.totalorder %v70, 15
  %v79 = vld [vmem:[%s3] sm:$0xff]
  %v80 = vld [vmem:[%s0] sm:$0xff]
  %v81 = vld [vmem:[%s0 + $0x8] sm:$0xff]
  %v82 = vld [vmem:[%s0 + $0x10] sm:$0xff]
  %v83 = vld [vmem:[%s0 + $0x18] sm:$0xff]
  %v84 = vrot.slane %v80, 7
  %v85 = vrot.slane %v81, 7
  %v86 = vrot.slane %v82, 7
  %v87 = vrot.slane %v83, 7
  %vm88 = vcmp.lt.s32.totalorder %v19, 1
  %v89 = vsel %vm88, %v86, %v87
  %v90 = vsel %vm88, %v85, %v86
  %v91 = vsel %vm88, %v84, %v85
  %v92 = vsel %vm88, %v87, %v84
  %v93 = vsel %vm71, 1, 0
  %v94 = vsel %vm72, 1, 0
  %v95 = vsel %vm73, 1, 0
  %v96 = vsel %vm74, 1, 0
  %vm97 = vcmp.eq.s32.totalorder %v93, 1
  %vm98 = vcmp.eq.s32.totalorder %v94, 1
  %vm99 = vcmp.eq.s32.totalorder %v95, 1
  %vm100 = vcmp.eq.s32.totalorder %v96, 1
  %v101 = vsel %vm97, 0.0, %v92
  %v102 = vsel %vm98, 0.0, %v91
  %v103 = vsel %vm99, 0.0, %v90
  %v104 = vsel %vm100, 0.0, %v89
  %v105 = vrot.slane %v80, 1
  %v106 = vrot.slane %v81, 1
  %v107 = vrot.slane %v82, 1
  %v108 = vrot.slane %v83, 1
  %vm109 = vcmp.lt.s32.totalorder %v19, 7
  %v110 = vsel %vm109, %v107, %v108
  %v111 = vsel %vm109, %v106, %v107
  %v112 = vsel %vm109, %v105, %v106
  %v113 = vsel %vm109, %v108, %v105
  %v114 = vsel %vm75, 1, 0
  %v115 = vsel %vm76, 1, 0
  %v116 = vsel %vm77, 1, 0
  %v117 = vsel %vm78, 1, 0
  %vm118 = vcmp.eq.s32.totalorder %v114, 1
  %vm119 = vcmp.eq.s32.totalorder %v115, 1
  %vm120 = vcmp.eq.s32.totalorder %v116, 1
  %vm121 = vcmp.eq.s32.totalorder %v117, 1
  %v122 = vsel %vm118, 0.0, %v112
  %v123 = vsel %vm119, 0.0, %v111
  %v124 = vsel %vm120, 0.0, %v110
  %v125 = vsel %vm121, 0.0, %v113
  %130 = vrot.lane.b32.xlu0 %v80, 32
  %v131 = vpop.permute.xlu0 %130
  %132 = vrot.lane.b32.xlu0 %v81, 32
  %v133 = vpop.permute.xlu0 %132
  %134 = vrot.lane.b32.xlu0 %v82, 32
  %v135 = vpop.permute.xlu0 %134
  %136 = vrot.lane.b32.xlu0 %v83, 32
  %v137 = vpop.permute.xlu0 %136
  %146 = vrot.lane.b32.xlu0 %v122, 64
  %v147 = vpop.permute.xlu0 %146
  %148 = vrot.lane.b32.xlu0 %v123, 64
  %v149 = vpop.permute.xlu0 %148
  %150 = vrot.lane.b32.xlu0 %v124, 64
  %v151 = vpop.permute.xlu0 %150
  %152 = vrot.lane.b32.xlu0 %v125, 64
  %v153 = vpop.permute.xlu0 %152
  %vm158 = vcmask 261120
  %v159 = vsel %vm158, %v101, %v131
  %v160 = vsel %vm158, %v102, %v133
  %v161 = vsel %vm158, %v103, %v135
  %v162 = vsel %vm158, %v104, %v137
  %vm163 = vcmask 523264
  %v164 = vsel %vm163, %v159, %v147
  %v165 = vsel %vm163, %v160, %v149
  %v166 = vsel %vm163, %v161, %v151
  %v167 = vsel %vm163, %v162, %v153
  %v168 = vpack.c.bf16 %v165, %v164
  %v169 = vpack.c.bf16 %v167, %v166
  %v170 = vld [vmem:[%s1] sm:$0xf]
  %v171 = vld [vmem:[%s1 + $0x4] sm:$0xf]
  %v172 = vld [vmem:[%s1 + $0x8] sm:$0xf]
  %v173 = vld [vmem:[%s1 + $0xc] sm:$0xf]
  %v174 = vld [vmem:[%s1 + $0x10] sm:$0xf]
  %v175 = vld [vmem:[%s1 + $0x14] sm:$0xf]
  %v176 = vld [vmem:[%s1 + $0x18] sm:$0xf]
  %v177 = vld [vmem:[%s1 + $0x1c] sm:$0xf]
  %v178 = vld [vmem:[%s1 + $0x20] sm:$0xf]
  %v179 = vld [vmem:[%s1 + $0x24] sm:$0xf]
  %v180 = vld [vmem:[%s1 + $0x28] sm:$0xf]
  %v181 = vld [vmem:[%s1 + $0x2c] sm:$0xf]
  %v182 = vperm.slane %v79, 0
  %v195 = vunpack.c.l.b16 %v170
  %v196 = vunpack.c.l.b16 %v171
  %v197 = vunpack.c.l.b16 %v172
  %v198 = vunpack.c.l.b16 %v173
  %v199 = vunpack.c.l.b16 %v174
  %v200 = vunpack.c.l.b16 %v175
  %v201 = vunpack.c.l.b16 %v176
  %v202 = vunpack.c.l.b16 %v177
  %v203 = vunpack.c.l.b16 %v178
  %v204 = vunpack.c.l.b16 %v179
  %v205 = vunpack.c.l.b16 %v180
  %v206 = vunpack.c.l.b16 %v181
  %v207 = vpack.c.b16 %v196, %v195
  %v208 = vpack.c.b16 %v198, %v197
  %v209 = vpack.c.b16 %v200, %v199
  %v210 = vpack.c.b16 %v202, %v201
  %v211 = vpack.c.b16 %v204, %v203
  %v212 = vpack.c.b16 %v206, %v205
  %vm219 = vcmask 785408
  %v221 = vsel %vm219, %v168, 0
  %v224 = vsel %vm219, %v169, 0
  %226 = vmatpush.bf16.msra.mxu0 0
  %227 = vmatpush.bf16.msra.mxu0 0
  %228 = vmatpush.bf16.msra.mxu0 %v212
  %229 = vmatpush.bf16.msra.mxu0 %v211
  %230 = vmatpush.bf16.msra.mxu0 %v210
  %231 = vmatpush.bf16.msra.mxu0 %v209
  %232 = vmatpush.bf16.msra.mxu0 %v208
  %233 = vmatpush.bf16.msra.mxu0 %v207
  %234 = vmatmul.bf16.gmra.mxu0 %v221
  %v235 = vpop.f32.mrf.mxu0
  %v236 = vadd.f32 %v182, %v235
  %v237 = vpop.f32.mrf.mxu0
  %v238 = vadd.f32 %v182, %v237
  %239 = vmatmul.bf16.gmra.mxu0 %v224
  %v240 = vpop.f32.mrf.mxu0
  %v241 = vadd.f32 %v182, %v240
  %v242 = vpop.f32.mrf.mxu0
  %v243 = vadd.f32 %v182, %v242
  %244 = vdwg.mxu0
  %v245 = vmax.f32 %v236, 0.0
  %v246 = vmax.f32 %v238, 0.0
  %v247 = vmax.f32 %v241, 0.0
  %v248 = vmax.f32 %v243, 0.0
  %v249 = vsel %vm158, %v245, 0.0
  %250 = vadd.xlane.f32.xlu0 %v249
  %v251 = vpop.xlane.xlu0 %250
  %v252 = vsel %vm158, %v246, 0.0
  %253 = vadd.xlane.f32.xlu0 %v252
  %v254 = vpop.xlane.xlu0 %253
  %v255 = vsel %vm158, %v247, 0.0
  %256 = vadd.xlane.f32.xlu0 %v255
  %v257 = vpop.xlane.xlu0 %256
  %v258 = vsel %vm158, %v248, 0.0
  %259 = vadd.xlane.f32.xlu0 %v258
  %v260 = vpop.xlane.xlu0 %259
  %v261 = vmul.f32 %v245, %v245
  %v262 = vmul.f32 %v246, %v246
  %v263 = vmul.f32 %v247, %v247
  %v264 = vmul.f32 %v248, %v248
  %v265 = vsel %vm158, %v261, 0.0
  %266 = vadd.xlane.f32.xlu0 %v265
  %v267 = vpop.xlane.xlu0 %266
  %v268 = vsel %vm158, %v262, 0.0
  %269 = vadd.xlane.f32.xlu0 %v268
  %v270 = vpop.xlane.xlu0 %269
  %v271 = vsel %vm158, %v263, 0.0
  %272 = vadd.xlane.f32.xlu0 %v271
  %v273 = vpop.xlane.xlu0 %272
  %v274 = vsel %vm158, %v264, 0.0
  %275 = vadd.xlane.f32.xlu0 %v274
  %v276 = vpop.xlane.xlu0 %275
  %v277 = vmul.f32 %v251, 0.03125
  %v278 = vmul.f32 %v254, 0.03125
  %v279 = vmul.f32 %v257, 0.03125
  %v280 = vmul.f32 %v260, 0.03125
  %v281 = vmul.f32 %v267, 0.03125
  %v282 = vmul.f32 %v270, 0.03125
  %v283 = vmul.f32 %v273, 0.03125
  %v284 = vmul.f32 %v276, 0.03125
  %v285 = vmul.f32 %v277, %v277
  %v286 = vmul.f32 %v278, %v278
  %v287 = vmul.f32 %v279, %v279
  %v288 = vmul.f32 %v280, %v280
  %v289 = vsub.f32 %v281, %v285
  %v290 = vsub.f32 %v282, %v286
  %v291 = vsub.f32 %v283, %v287
  %v292 = vsub.f32 %v284, %v288
  %v293 = vmax.f32 %v289, 0.0
  %v294 = vmax.f32 %v290, 0.0
  %v295 = vmax.f32 %v291, 0.0
  %v296 = vmax.f32 %v292, 0.0
  %v297 = vsub.f32 %v245, %v277
  %v298 = vsub.f32 %v246, %v278
  %v299 = vsub.f32 %v247, %v279
  %v300 = vsub.f32 %v248, %v280
  %v301 = vadd.f32 %v293, 1e-12
  %v302 = vadd.f32 %v294, 1e-12
  %v303 = vadd.f32 %v295, 1e-12
  %v304 = vadd.f32 %v296, 1e-12
  %v305 = vrsqrt.pop %v301
  %v306 = vmul.f32 %v305, %v301
  %v307 = vmul.f32 %v306, %v305
  %v308 = vmul.f32 0.5, %v307
  %v309 = vsub.f32 1.5, %v308
  %v310 = vmul.f32 %v305, %v309
  %vm311 = vweird.f32 %v301
  %vm312 = vweird.f32 %v305
  %vm313 = vmor %vm311, %vm312
  %v314 = vsel %vm313, %v305, %v310
  %v315 = vrsqrt.pop %v302
  %v316 = vmul.f32 %v315, %v302
  %v317 = vmul.f32 %v316, %v315
  %v318 = vmul.f32 0.5, %v317
  %v319 = vsub.f32 1.5, %v318
  %v320 = vmul.f32 %v315, %v319
  %vm321 = vweird.f32 %v302
  %vm322 = vweird.f32 %v315
  %vm323 = vmor %vm321, %vm322
  %v324 = vsel %vm323, %v315, %v320
  %v325 = vrsqrt.pop %v303
  %v326 = vmul.f32 %v325, %v303
  %v327 = vmul.f32 %v326, %v325
  %v328 = vmul.f32 0.5, %v327
  %v329 = vsub.f32 1.5, %v328
  %v330 = vmul.f32 %v325, %v329
  %vm331 = vweird.f32 %v303
  %vm332 = vweird.f32 %v325
  %vm333 = vmor %vm331, %vm332
  %v334 = vsel %vm333, %v325, %v330
  %v335 = vrsqrt.pop %v304
  %v336 = vmul.f32 %v335, %v304
  %v337 = vmul.f32 %v336, %v335
  %v338 = vmul.f32 0.5, %v337
  %v339 = vsub.f32 1.5, %v338
  %v340 = vmul.f32 %v335, %v339
  %vm341 = vweird.f32 %v304
  %vm342 = vweird.f32 %v335
  %vm343 = vmor %vm341, %vm342
  %v344 = vsel %vm343, %v335, %v340
  %v345 = vmul.f32 %v297, %v314
  %v346 = vmul.f32 %v298, %v324
  %v347 = vmul.f32 %v299, %v334
  %v348 = vmul.f32 %v300, %v344
  %v349 = vperm.slane %v79, 1
  %v350 = vmul.f32 %v345, %v349
  %v351 = vmul.f32 %v346, %v349
  %v352 = vmul.f32 %v347, %v349
  %v353 = vmul.f32 %v348, %v349
  %v354 = vperm.slane %v79, 2
  %v355 = vadd.f32 %v350, %v354
  %v356 = vadd.f32 %v351, %v354
  %v357 = vadd.f32 %v352, %v354
  %v358 = vadd.f32 %v353, %v354
  %v359 = vrot.slane %v355, 7
  %v360 = vrot.slane %v356, 7
  %v361 = vrot.slane %v357, 7
  %v362 = vrot.slane %v358, 7
  %v363 = vsel %vm88, %v361, %v362
  %v364 = vsel %vm88, %v360, %v361
  %v365 = vsel %vm88, %v359, %v360
  %v366 = vsel %vm88, %v362, %v359
  %v367 = vsel %vm97, 0.0, %v366
  %v368 = vsel %vm98, 0.0, %v365
  %v369 = vsel %vm99, 0.0, %v364
  %v370 = vsel %vm100, 0.0, %v363
  %v371 = vrot.slane %v355, 1
  %v372 = vrot.slane %v356, 1
  %v373 = vrot.slane %v357, 1
  %v374 = vrot.slane %v358, 1
  %v375 = vsel %vm109, %v373, %v374
  %v376 = vsel %vm109, %v372, %v373
  %v377 = vsel %vm109, %v371, %v372
  %v378 = vsel %vm109, %v374, %v371
  %v379 = vsel %vm118, 0.0, %v377
  %v380 = vsel %vm119, 0.0, %v376
  %v381 = vsel %vm120, 0.0, %v375
  %v382 = vsel %vm121, 0.0, %v378
  %387 = vrot.lane.b32.xlu0 %v355, 32
  %v388 = vpop.permute.xlu0 %387
  %389 = vrot.lane.b32.xlu0 %v356, 32
  %v390 = vpop.permute.xlu0 %389
  %391 = vrot.lane.b32.xlu0 %v357, 32
  %v392 = vpop.permute.xlu0 %391
  %393 = vrot.lane.b32.xlu0 %v358, 32
  %v394 = vpop.permute.xlu0 %393
  %403 = vrot.lane.b32.xlu0 %v379, 64
  %v404 = vpop.permute.xlu0 %403
  %405 = vrot.lane.b32.xlu0 %v380, 64
  %v406 = vpop.permute.xlu0 %405
  %407 = vrot.lane.b32.xlu0 %v381, 64
  %v408 = vpop.permute.xlu0 %407
  %409 = vrot.lane.b32.xlu0 %v382, 64
  %v410 = vpop.permute.xlu0 %409
  %v415 = vsel %vm158, %v367, %v388
  %v416 = vsel %vm158, %v368, %v390
  %v417 = vsel %vm158, %v369, %v392
  %v418 = vsel %vm158, %v370, %v394
  %v419 = vsel %vm163, %v415, %v404
  %v420 = vsel %vm163, %v416, %v406
  %v421 = vsel %vm163, %v417, %v408
  %v422 = vsel %vm163, %v418, %v410
  %v423 = vpack.c.bf16 %v420, %v419
  %v424 = vpack.c.bf16 %v422, %v421
  %v425 = vld [vmem:[%s2] sm:$0xf]
  %v426 = vld [vmem:[%s2 + $0x4] sm:$0xf]
  %v427 = vld [vmem:[%s2 + $0x8] sm:$0xf]
  %v428 = vld [vmem:[%s2 + $0xc] sm:$0xf]
  %v429 = vld [vmem:[%s2 + $0x10] sm:$0xf]
  %v430 = vld [vmem:[%s2 + $0x14] sm:$0xf]
  %v431 = vld [vmem:[%s2 + $0x18] sm:$0xf]
  %v432 = vld [vmem:[%s2 + $0x1c] sm:$0xf]
  %v433 = vld [vmem:[%s2 + $0x20] sm:$0xf]
  %v434 = vld [vmem:[%s2 + $0x24] sm:$0xf]
  %v435 = vld [vmem:[%s2 + $0x28] sm:$0xf]
  %v436 = vld [vmem:[%s2 + $0x2c] sm:$0xf]
  %v437 = vperm.slane %v79, 3
  %v450 = vunpack.c.l.b16 %v425
  %v451 = vunpack.c.l.b16 %v426
  %v452 = vunpack.c.l.b16 %v427
  %v453 = vunpack.c.l.b16 %v428
  %v454 = vunpack.c.l.b16 %v429
  %v455 = vunpack.c.l.b16 %v430
  %v456 = vunpack.c.l.b16 %v431
  %v457 = vunpack.c.l.b16 %v432
  %v458 = vunpack.c.l.b16 %v433
  %v459 = vunpack.c.l.b16 %v434
  %v460 = vunpack.c.l.b16 %v435
  %v461 = vunpack.c.l.b16 %v436
  %v462 = vpack.c.b16 %v451, %v450
  %v463 = vpack.c.b16 %v453, %v452
  %v464 = vpack.c.b16 %v455, %v454
  %v465 = vpack.c.b16 %v457, %v456
  %v466 = vpack.c.b16 %v459, %v458
  %v467 = vpack.c.b16 %v461, %v460
  %v475 = vsel %vm219, %v423, 0
  %v478 = vsel %vm219, %v424, 0
  %480 = vmatpush.bf16.msra.mxu0 0
  %481 = vmatpush.bf16.msra.mxu0 0
  %482 = vmatpush.bf16.msra.mxu0 %v467
  %483 = vmatpush.bf16.msra.mxu0 %v466
  %484 = vmatpush.bf16.msra.mxu0 %v465
  %485 = vmatpush.bf16.msra.mxu0 %v464
  %486 = vmatpush.bf16.msra.mxu0 %v463
  %487 = vmatpush.bf16.msra.mxu0 %v462
  %488 = vmatmul.bf16.gmra.mxu0 %v475
  %v489 = vpop.f32.mrf.mxu0
  %v490 = vadd.f32 %v437, %v489
  %v491 = vpop.f32.mrf.mxu0
  %v492 = vadd.f32 %v437, %v491
  %493 = vmatmul.bf16.gmra.mxu0 %v478
  %v494 = vpop.f32.mrf.mxu0
  %v495 = vadd.f32 %v437, %v494
  %v496 = vpop.f32.mrf.mxu0
  %v497 = vadd.f32 %v437, %v496
  %498 = vdwg.mxu0
  %v499 = vmax.f32 %v490, 0.0
  %v500 = vmax.f32 %v492, 0.0
  %v501 = vmax.f32 %v495, 0.0
  %v502 = vmax.f32 %v497, 0.0
  %v503 = vsel %vm158, %v499, 0.0
  %504 = vadd.xlane.f32.xlu0 %v503
  %v505 = vpop.xlane.xlu0 %504
  %v506 = vsel %vm158, %v500, 0.0
  %507 = vadd.xlane.f32.xlu0 %v506
  %v508 = vpop.xlane.xlu0 %507
  %v509 = vsel %vm158, %v501, 0.0
  %510 = vadd.xlane.f32.xlu0 %v509
  %v511 = vpop.xlane.xlu0 %510
  %v512 = vsel %vm158, %v502, 0.0
  %513 = vadd.xlane.f32.xlu0 %v512
  %v514 = vpop.xlane.xlu0 %513
  %v515 = vmul.f32 %v499, %v499
  %v516 = vmul.f32 %v500, %v500
  %v517 = vmul.f32 %v501, %v501
  %v518 = vmul.f32 %v502, %v502
  %v519 = vsel %vm158, %v515, 0.0
  %520 = vadd.xlane.f32.xlu0 %v519
  %v521 = vpop.xlane.xlu0 %520
  %v522 = vsel %vm158, %v516, 0.0
  %523 = vadd.xlane.f32.xlu0 %v522
  %v524 = vpop.xlane.xlu0 %523
  %v525 = vsel %vm158, %v517, 0.0
  %526 = vadd.xlane.f32.xlu0 %v525
  %v527 = vpop.xlane.xlu0 %526
  %v528 = vsel %vm158, %v518, 0.0
  %529 = vadd.xlane.f32.xlu0 %v528
  %v530 = vpop.xlane.xlu0 %529
  %v531 = vmul.f32 %v505, 0.03125
  %v532 = vmul.f32 %v508, 0.03125
  %v533 = vmul.f32 %v511, 0.03125
  %v534 = vmul.f32 %v514, 0.03125
  %v535 = vmul.f32 %v521, 0.03125
  %v536 = vmul.f32 %v524, 0.03125
  %v537 = vmul.f32 %v527, 0.03125
  %v538 = vmul.f32 %v530, 0.03125
  %v539 = vmul.f32 %v531, %v531
  %v540 = vmul.f32 %v532, %v532
  %v541 = vmul.f32 %v533, %v533
  %v542 = vmul.f32 %v534, %v534
  %v543 = vsub.f32 %v535, %v539
  %v544 = vsub.f32 %v536, %v540
  %v545 = vsub.f32 %v537, %v541
  %v546 = vsub.f32 %v538, %v542
  %v547 = vmax.f32 %v543, 0.0
  %v548 = vmax.f32 %v544, 0.0
  %v549 = vmax.f32 %v545, 0.0
  %v550 = vmax.f32 %v546, 0.0
  %v551 = vperm.slane %v79, 4
  %v552 = vmul.f32 %v499, %v551
  %v553 = vmul.f32 %v500, %v551
  %v554 = vmul.f32 %v501, %v551
  %v555 = vmul.f32 %v502, %v551
  %v556 = vsel %vm158, %v552, 0.0
  %557 = vadd.xlane.f32.xlu0 %v556
  %v558 = vpop.xlane.xlu0 %557
  %v559 = vsel %vm158, %v553, 0.0
  %560 = vadd.xlane.f32.xlu0 %v559
  %v561 = vpop.xlane.xlu0 %560
  %v562 = vsel %vm158, %v554, 0.0
  %563 = vadd.xlane.f32.xlu0 %v562
  %v564 = vpop.xlane.xlu0 %563
  %v565 = vsel %vm158, %v555, 0.0
  %566 = vadd.xlane.f32.xlu0 %v565
  %v567 = vpop.xlane.xlu0 %566
  %v568 = vadd.f32 %v547, 1e-12
  %v569 = vadd.f32 %v548, 1e-12
  %v570 = vadd.f32 %v549, 1e-12
  %v571 = vadd.f32 %v550, 1e-12
  %v572 = vrsqrt.pop %v568
  %v573 = vmul.f32 %v572, %v568
  %v574 = vmul.f32 %v573, %v572
  %v575 = vmul.f32 0.5, %v574
  %v576 = vsub.f32 1.5, %v575
  %v577 = vmul.f32 %v572, %v576
  %vm578 = vweird.f32 %v568
  %vm579 = vweird.f32 %v572
  %vm580 = vmor %vm578, %vm579
  %v581 = vsel %vm580, %v572, %v577
  %v582 = vrsqrt.pop %v569
  %v583 = vmul.f32 %v582, %v569
  %v584 = vmul.f32 %v583, %v582
  %v585 = vmul.f32 0.5, %v584
  %v586 = vsub.f32 1.5, %v585
  %v587 = vmul.f32 %v582, %v586
  %vm588 = vweird.f32 %v569
  %vm589 = vweird.f32 %v582
  %vm590 = vmor %vm588, %vm589
  %v591 = vsel %vm590, %v582, %v587
  %v592 = vrsqrt.pop %v570
  %v593 = vmul.f32 %v592, %v570
  %v594 = vmul.f32 %v593, %v592
  %v595 = vmul.f32 0.5, %v594
  %v596 = vsub.f32 1.5, %v595
  %v597 = vmul.f32 %v592, %v596
  %vm598 = vweird.f32 %v570
  %vm599 = vweird.f32 %v592
  %vm600 = vmor %vm598, %vm599
  %v601 = vsel %vm600, %v592, %v597
  %v602 = vrsqrt.pop %v571
  %v603 = vmul.f32 %v602, %v571
  %v604 = vmul.f32 %v603, %v602
  %v605 = vmul.f32 0.5, %v604
  %v606 = vsub.f32 1.5, %v605
  %v607 = vmul.f32 %v602, %v606
  %vm608 = vweird.f32 %v571
  %vm609 = vweird.f32 %v602
  %vm610 = vmor %vm608, %vm609
  %v611 = vsel %vm610, %v602, %v607
  %v612 = vperm.slane %v79, 5
  %v613 = vmul.f32 %v531, %v612
  %v614 = vmul.f32 %v532, %v612
  %v615 = vmul.f32 %v533, %v612
  %v616 = vmul.f32 %v534, %v612
  %v617 = vsub.f32 %v558, %v613
  %v618 = vsub.f32 %v561, %v614
  %v619 = vsub.f32 %v564, %v615
  %v620 = vsub.f32 %v567, %v616
  %v621 = vmul.f32 %v581, %v617
  %v622 = vmul.f32 %v591, %v618
  %v623 = vmul.f32 %v601, %v619
  %v624 = vmul.f32 %v611, %v620
  %v625 = vperm.slane %v79, 6
  %v626 = vadd.f32 %v621, %v625
  %v627 = vadd.f32 %v622, %v625
  %v628 = vadd.f32 %v623, %v625
  %v629 = vadd.f32 %v624, %v625
  %vm630 = vcmask 7168
  %631 = vst.msk [vmem:[%s4] sm:$0xff] %vm630, %v626
  %632 = vst.msk [vmem:[%s4 + $0x8] sm:$0xff] %vm630, %v627
  %633 = vst.msk [vmem:[%s4 + $0x10] sm:$0xff] %vm630, %v628
  %634 = vst.msk [vmem:[%s4 + $0x18] sm:$0xff] %vm630, %v629
  // Predicated region
  $region18: #{tpu_custom_call.1} parent=0 // pred_check
    _
  $region19: #{tpu_custom_call.1} parent=0 // pred_check_branch
    %636 = sbr.rel (0) target = $region21
  $region20: #{tpu_custom_call.1} parent=0 // pred_region
    _
  $region21: #{tpu_custom_call.1} parent=0 // pred_fallthru
    _
  // Predicated region
  $region22: #{tpu_custom_call.1} parent=0 // pred_check
    _
  $region23: #{tpu_custom_call.1} parent=0 // pred_check_branch
    %638 = sbr.rel (0) target = $region25
  $region24: #{tpu_custom_call.1} parent=0 // pred_region
    _
  $region25: #{tpu_custom_call.1} parent=0 // pred_fallthru
    _

</llo_original>
